<compile_context>
chip_gen: v7x
topology: tpu7x:2x2x1
jax: 0.10.0
libtpu: 0.0.40
codegen_flags: <defaults>
</compile_context>

<pallas_src>
import functools
import math

import jax
import jax.numpy as jnp
from jax import lax
from jax.experimental import pallas as pl
from jax.experimental.pallas import tpu as pltpu


def _conv_kernel(x_ref, w_ref, o_ref, *, n, kh, kw, w_img, s_pad):
    """Single grid step processes the whole (tiny) batch.

    x_ref : (N, 2*C_in, s_pad)  pair base: rows [0:C_in] = flattened zero-padded image,
                                rows [C_in:2*C_in] = same image shifted left by 1 lane.
    w_ref : (C_out, K)          K = kh * ceil(kw/2) * 2*C_in; zero columns where a
                                piece's second tap does not exist.
    o_ref : (N, C_out, s_pad)   flattened output rows; garbage columns >= h_out*w_img
                                are sliced off by the wrapper.
    """
    w = w_ref[...]
    for b in range(n):                          # static unroll, tiny N
        base = x_ref[b]                         # (2*C_in, s_pad) — one full sublane granule
        pieces = []
        for i in range(kh):
            for j0 in range(0, kw, 2):          # each piece covers taps (i, j0) and (i, j0+1)
                d = i * w_img + j0
                if d == 0:
                    pieces.append(base)
                else:
                    # lane rotation on the XLU; valid output lanes never read wrapped data
                    pieces.append(pltpu.roll(base, shift=s_pad - d, axis=1))
        patches = jnp.concatenate(pieces, axis=0)           # (K, s_pad), granule aligned
        acc = jnp.dot(w, patches, preferred_element_type=jnp.float32)
        o_ref[b] = acc.astype(o_ref.dtype)                   # full-width (s_pad) store


@functools.partial(jax.jit, static_argnames=("stride", "padding", "dilation"))
def conv2d_pallas(x_nchw, weight_oihw, *, stride=1, padding=2, dilation=1):
    """Semantics of torch.nn.functional.conv2d(x, w, None, stride, padding, dilation, 1)."""
    assert stride == 1 and dilation == 1, "only stride=1, dilation=1 implemented"
    n, c_in, h, w = x_nchw.shape
    c_out, c_in_w, kh, kw = weight_oihw.shape
    assert c_in_w == c_in, "groups != 1 not implemented"

    h_img = h + 2 * padding                     # padded image height
    w_img = w + 2 * padding                     # padded image width (= output row stride)
    h_out = h_img - (kh - 1)
    w_out = w_img - (kw - 1)
    m_out = h_out * w_img                       # valid flattened output length
    # Every non-zero-weight tap read stays below h_img*w_img + (kw - 1); pad lanes to x128.
    s_pad = pl.cdiv(h_img * w_img + kw - 1, 128) * 128

    # ---- wrapper glue (all tiny, no activation transposes) ----
    x_pad = jnp.pad(x_nchw, ((0, 0), (0, 0), (padding, padding), (padding, padding)))
    x_flat = x_pad.reshape(n, c_in, h_img * w_img)
    x_flat = jnp.pad(x_flat, ((0, 0), (0, 0), (0, s_pad - h_img * w_img)))
    x_shift = jnp.pad(x_flat[:, :, 1:], ((0, 0), (0, 0), (0, 1)))    # shifted-by-1 copy
    base = jnp.concatenate([x_flat, x_shift], axis=1)                # (N, 2*C_in, s_pad)

    # Weight as (C_out, K): per (row i, even col j0) a block of
    # [W[:, :, i, j0], W[:, :, i, j0+1] or zeros] matching the pair-base pieces.
    zero_blk = jnp.zeros((c_out, c_in), weight_oihw.dtype)
    blocks = []
    for i in range(kh):
        for j0 in range(0, kw, 2):
            blocks.append(weight_oihw[:, :, i, j0])
            blocks.append(weight_oihw[:, :, i, j0 + 1] if j0 + 1 < kw else zero_blk)
    w_mat = jnp.concatenate(blocks, axis=1)                          # (C_out, K)
    k_tot = w_mat.shape[1]

    kernel = functools.partial(
        _conv_kernel, n=n, kh=kh, kw=kw, w_img=w_img, s_pad=s_pad)

    out_flat = pl.pallas_call(
        kernel,
        out_shape=jax.ShapeDtypeStruct((n, c_out, s_pad), x_nchw.dtype),
        grid_spec=pltpu.PrefetchScalarGridSpec(
            num_scalar_prefetch=0,
            grid=(1,),                                               # batch merged: 1 step
            in_specs=[
                pl.BlockSpec((n, 2 * c_in, s_pad), lambda g: (0, 0, 0)),
                pl.BlockSpec((c_out, k_tot), lambda g: (0, 0)),
            ],
            out_specs=pl.BlockSpec((n, c_out, s_pad), lambda g: (0, 0, 0)),
        ),
        compiler_params=pltpu.CompilerParams(dimension_semantics=("arbitrary",)),
    )(base, w_mat)

    # Drop pad / stride-garbage columns; reshape is free.
    out = out_flat[:, :, :m_out].reshape(n, c_out, h_out, w_img)[..., :w_out]
    return out


def init_weight(key, out_channels, in_channels, kernel_size):
    """Deterministic kaiming_uniform_(a=sqrt(5)) equivalent: U(-1/sqrt(fan_in), 1/sqrt(fan_in))."""
    kh, kw = kernel_size
    fan_in = in_channels * kh * kw
    bound = 1.0 / math.sqrt(fan_in)
    return jax.random.uniform(
        key, (out_channels, in_channels, kh, kw),
        minval=-bound, maxval=bound, dtype=jnp.float32)


if __name__ == "__main__":
    key = jax.random.PRNGKey(0)
    kx, kw_ = jax.random.split(key)

    N, C_IN, H, W = 2, 4, 16, 16
    C_OUT = 8
    KSIZE = (3, 3)

    x = jax.random.normal(kx, (N, C_IN, H, W), dtype=jnp.float32)
    weight = init_weight(kw_, C_OUT, C_IN, KSIZE)

    out = conv2d_pallas(x, weight, stride=1, padding=2, dilation=1)
    out = jax.block_until_ready(out)

    # Reference check against XLA conv (same semantics as F.conv2d).
    ref = lax.conv_general_dilated(
        x, weight, window_strides=(1, 1), padding=((2, 2), (2, 2)),
        dimension_numbers=("NCHW", "OIHW", "NCHW"))
    assert out.shape == ref.shape, (out.shape, ref.shape)
    assert jnp.allclose(out, ref, atol=1e-5, rtol=1e-5)

    print("KERNEL_OK")
</pallas_src>

<mosaic_0001>
module attributes {stable_mosaic.version = 11 : i64} {
  func.func @_conv_kernel(%arg0: i32, %arg1: memref<2x8x512xf32, #tpu.memory_space<vmem>>, %arg2: memref<8x48xf32, #tpu.memory_space<vmem>>, %arg3: memref<2x8x512xf32, #tpu.memory_space<vmem>>) attributes {dimension_semantics = [#tpu.dimension_semantics<arbitrary>], iteration_bounds = array<i64: 1>, scalar_prefetch = 0 : i64, scratch_operands = 0 : i64, tpu.core_type = #tpu.core_type<tc>, window_params = [{pipeline_mode = #tpu.pipeline_mode<synchronous>, transform_indices = @transform_0, window_bounds = array<i64: 2, 8, 512>}, {pipeline_mode = #tpu.pipeline_mode<synchronous>, transform_indices = @transform_1, window_bounds = array<i64: 8, 48>}, {pipeline_mode = #tpu.pipeline_mode<synchronous>, transform_indices = @transform_2, window_bounds = array<i64: 2, 8, 512>}]} {
    %c0 = arith.constant 0 : index
    %c0_0 = arith.constant 0 : index
    %0 = vector.load %arg2[%c0, %c0_0] : memref<8x48xf32, #tpu.memory_space<vmem>>, vector<8x48xf32>
    %c0_1 = arith.constant 0 : index
    %c0_2 = arith.constant 0 : index
    %c0_3 = arith.constant 0 : index
    %1 = vector.load %arg1[%c0_1, %c0_2, %c0_3] : memref<2x8x512xf32, #tpu.memory_space<vmem>>, vector<1x8x512xf32>
    %2 = vector.shape_cast %1 : vector<1x8x512xf32> to vector<8x512xf32>
    %c510_i32 = arith.constant 510 : i32
    %3 = tpu.dynamic_rotate %2 by %c510_i32 dim 1 : vector<8x512xf32>, i32 -> vector<8x512xf32>
    %c492_i32 = arith.constant 492 : i32
    %4 = tpu.dynamic_rotate %2 by %c492_i32 dim 1 : vector<8x512xf32>, i32 -> vector<8x512xf32>
    %c490_i32 = arith.constant 490 : i32
    %5 = tpu.dynamic_rotate %2 by %c490_i32 dim 1 : vector<8x512xf32>, i32 -> vector<8x512xf32>
    %c472_i32 = arith.constant 472 : i32
    %6 = tpu.dynamic_rotate %2 by %c472_i32 dim 1 : vector<8x512xf32>, i32 -> vector<8x512xf32>
    %c470_i32 = arith.constant 470 : i32
    %7 = tpu.dynamic_rotate %2 by %c470_i32 dim 1 : vector<8x512xf32>, i32 -> vector<8x512xf32>
    %8 = tpu.concatenate %2, %3, %4, %5, %6, %7 in 0 : vector<8x512xf32>, vector<8x512xf32>, vector<8x512xf32>, vector<8x512xf32>, vector<8x512xf32>, vector<8x512xf32> -> vector<48x512xf32>
    %cst = arith.constant dense<0.000000e+00> : vector<8x512xf32>
    %9 = tpu.matmul %0, %8, %cst {dimension_numbers = #tpu.dot_dimension_numbers<[1], [0], [0], [1], [0, 0, 1, 1], [], []>} : vector<8x48xf32>, vector<48x512xf32>, vector<8x512xf32> -> vector<8x512xf32>
    %c0_4 = arith.constant 0 : index
    %c0_5 = arith.constant 0 : index
    %c0_6 = arith.constant 0 : index
    %10 = vector.load %arg3[%c0_4, %c0_5, %c0_6] : memref<2x8x512xf32, #tpu.memory_space<vmem>>, vector<1x8x512xf32>
    %11 = vector.shape_cast %10 : vector<1x8x512xf32> to vector<8x512xf32>
    %12 = vector.shape_cast %9 : vector<8x512xf32> to vector<1x8x512xf32>
    tpu.vector_store %arg3[%c0_4, %c0_5, %c0_6], %12 {strides = array<i32>} : memref<2x8x512xf32, #tpu.memory_space<vmem>>, vector<1x8x512xf32>,
    %c1 = arith.constant 1 : index
    %c0_7 = arith.constant 0 : index
    %c0_8 = arith.constant 0 : index
    %13 = vector.load %arg1[%c1, %c0_7, %c0_8] : memref<2x8x512xf32, #tpu.memory_space<vmem>>, vector<1x8x512xf32>
    %14 = vector.shape_cast %13 : vector<1x8x512xf32> to vector<8x512xf32>
    %c510_i32_9 = arith.constant 510 : i32
    %15 = tpu.dynamic_rotate %14 by %c510_i32_9 dim 1 : vector<8x512xf32>, i32 -> vector<8x512xf32>
    %c492_i32_10 = arith.constant 492 : i32
    %16 = tpu.dynamic_rotate %14 by %c492_i32_10 dim 1 : vector<8x512xf32>, i32 -> vector<8x512xf32>
    %c490_i32_11 = arith.constant 490 : i32
    %17 = tpu.dynamic_rotate %14 by %c490_i32_11 dim 1 : vector<8x512xf32>, i32 -> vector<8x512xf32>
    %c472_i32_12 = arith.constant 472 : i32
    %18 = tpu.dynamic_rotate %14 by %c472_i32_12 dim 1 : vector<8x512xf32>, i32 -> vector<8x512xf32>
    %c470_i32_13 = arith.constant 470 : i32
    %19 = tpu.dynamic_rotate %14 by %c470_i32_13 dim 1 : vector<8x512xf32>, i32 -> vector<8x512xf32>
    %20 = tpu.concatenate %14, %15, %16, %17, %18, %19 in 0 : vector<8x512xf32>, vector<8x512xf32>, vector<8x512xf32>, vector<8x512xf32>, vector<8x512xf32>, vector<8x512xf32> -> vector<48x512xf32>
    %cst_14 = arith.constant dense<0.000000e+00> : vector<8x512xf32>
    %21 = tpu.matmul %0, %20, %cst_14 {dimension_numbers = #tpu.dot_dimension_numbers<[1], [0], [0], [1], [0, 0, 1, 1], [], []>} : vector<8x48xf32>, vector<48x512xf32>, vector<8x512xf32> -> vector<8x512xf32>
    %c1_15 = arith.constant 1 : index
    %c0_16 = arith.constant 0 : index
    %c0_17 = arith.constant 0 : index
    %22 = vector.load %arg3[%c1_15, %c0_16, %c0_17] : memref<2x8x512xf32, #tpu.memory_space<vmem>>, vector<1x8x512xf32>
    %23 = vector.shape_cast %22 : vector<1x8x512xf32> to vector<8x512xf32>
    %24 = vector.shape_cast %21 : vector<8x512xf32> to vector<1x8x512xf32>
    tpu.vector_store %arg3[%c1_15, %c0_16, %c0_17], %24 {strides = array<i32>} : memref<2x8x512xf32, #tpu.memory_space<vmem>>, vector<1x8x512xf32>,
    return
  }
  func.func @transform_0(%arg0: i32) -> (i32, i32, i32) {
    %c0_i32 = arith.constant 0 : i32
    %c0_i32_0 = arith.constant 0 : i32
    %c0_i32_1 = arith.constant 0 : i32
    %c0_i32_2 = arith.constant 0 : i32
    return %c0_i32, %c0_i32_0, %c0_i32_1 : i32, i32, i32
  }
  func.func @transform_1(%arg0: i32) -> (i32, i32) {
    %c0_i32 = arith.constant 0 : i32
    %c0_i32_0 = arith.constant 0 : i32
    %c0_i32_1 = arith.constant 0 : i32
    return %c0_i32, %c0_i32_0 : i32, i32
  }
  func.func @transform_2(%arg0: i32) -> (i32, i32, i32) {
    %c0_i32 = arith.constant 0 : i32
    %c0_i32_0 = arith.constant 0 : i32
    %c0_i32_1 = arith.constant 0 : i32
    %c0_i32_2 = arith.constant 0 : i32
    return %c0_i32, %c0_i32_0, %c0_i32_1 : i32, i32, i32
  }
}

</mosaic_0001>

<llo_original>
// kernel: conv2d_pallas.1
$region0: #{conv2d_pallas.1}
  #allocation0 [shape = 'u32[]', space=smem, size = 0x4, offset = 0x4, fixed_abs, tag = 'smem constant byte address 0x4 - core index']
  #allocation1 [shape = 'u32[144,128]{1,0:T(1,128)}', space=vmem, size = 0x12000, scoped, tag = 'internal scratch']
  %s0 = inlined_call_operand.vmem [shape: f32[2,8,512], index: 0, kind: input, shape index: {}]
  %s1 = inlined_call_operand.vmem [shape: f32[8,48], index: 1, kind: input, shape index: {}]
  %s2 = inlined_call_operand.vmem [shape: f32[2,8,512], index: 2, kind: output, shape index: {}]
  %s3 = sld [smem:[#allocation0]]
  $region18: #{conv2d_pallas.1} parent=0
    _
  %s5 = ssub.s32 1, %s3
  %s6 = scalar_select 0, %s5, %s3
  // Predicated region
  $region2: #{conv2d_pallas.1} parent=0 // pred_check
    _
  $region3: #{conv2d_pallas.1} parent=0 // pred_check_branch
    %8 = sbr.rel (0) target = $region5
  $region4: #{conv2d_pallas.1} parent=0 // pred_region
    _
  $region5: #{conv2d_pallas.1} parent=0 // pred_fallthru
    _
  // Predicated region
  $region6: #{conv2d_pallas.1} parent=0 // pred_check
    _
  $region7: #{conv2d_pallas.1} parent=0 // pred_check_branch
    %10 = sbr.rel (0) target = $region9
  $region8: #{conv2d_pallas.1} parent=0 // pred_region
    _
  $region9: #{conv2d_pallas.1} parent=0 // pred_fallthru
    _
  %v11 = vld [vmem:[%s1] sm:$0xff]
  %v12 = vld [vmem:[%s0] sm:$0xff]
  %v13 = vld [vmem:[%s0 + $0x8] sm:$0xff]
  %v14 = vld [vmem:[%s0 + $0x10] sm:$0xff]
  %v15 = vld [vmem:[%s0 + $0x18] sm:$0xff]
  %16 = vrot.lane.b32.xlu0 %v12, 126
  %v17 = vpop.permute.xlu0 %16
  %18 = vrot.lane.b32.xlu0 %v13, 126
  %v19 = vpop.permute.xlu0 %18
  %20 = vrot.lane.b32.xlu0 %v14, 126
  %v21 = vpop.permute.xlu0 %20
  %22 = vrot.lane.b32.xlu0 %v15, 126
  %v23 = vpop.permute.xlu0 %22
  %v24 = vlaneseq
  %v25 = vand.u32 %v24, 127
  %vm26 = vcmp.lt.s32.totalorder %v25, 126
  %v27 = vsel %vm26, %v21, %v23
  %v28 = vsel %vm26, %v19, %v21
  %v29 = vsel %vm26, %v17, %v19
  %v30 = vsel %vm26, %v23, %v17
  %31 = vrot.lane.b32.xlu0 %v12, 108
  %v32 = vpop.permute.xlu0 %31
  %33 = vrot.lane.b32.xlu0 %v13, 108
  %v34 = vpop.permute.xlu0 %33
  %35 = vrot.lane.b32.xlu0 %v14, 108
  %v36 = vpop.permute.xlu0 %35
  %37 = vrot.lane.b32.xlu0 %v15, 108
  %v38 = vpop.permute.xlu0 %37
  %vm39 = vcmp.lt.s32.totalorder %v25, 108
  %v40 = vsel %vm39, %v36, %v38
  %v41 = vsel %vm39, %v34, %v36
  %v42 = vsel %vm39, %v32, %v34
  %v43 = vsel %vm39, %v38, %v32
  %44 = vrot.lane.b32.xlu0 %v12, 106
  %v45 = vpop.permute.xlu0 %44
  %46 = vrot.lane.b32.xlu0 %v13, 106
  %v47 = vpop.permute.xlu0 %46
  %48 = vrot.lane.b32.xlu0 %v14, 106
  %v49 = vpop.permute.xlu0 %48
  %50 = vrot.lane.b32.xlu0 %v15, 106
  %v51 = vpop.permute.xlu0 %50
  %vm52 = vcmp.lt.s32.totalorder %v25, 106
  %v53 = vsel %vm52, %v49, %v51
  %v54 = vsel %vm52, %v47, %v49
  %v55 = vsel %vm52, %v45, %v47
  %v56 = vsel %vm52, %v51, %v45
  %57 = vrot.lane.b32.xlu0 %v12, 88
  %v58 = vpop.permute.xlu0 %57
  %59 = vrot.lane.b32.xlu0 %v13, 88
  %v60 = vpop.permute.xlu0 %59
  %61 = vrot.lane.b32.xlu0 %v14, 88
  %v62 = vpop.permute.xlu0 %61
  %63 = vrot.lane.b32.xlu0 %v15, 88
  %v64 = vpop.permute.xlu0 %63
  %vm65 = vcmp.lt.s32.totalorder %v25, 88
  %v66 = vsel %vm65, %v62, %v64
  %v67 = vsel %vm65, %v60, %v62
  %v68 = vsel %vm65, %v58, %v60
  %v69 = vsel %vm65, %v64, %v58
  %70 = vrot.lane.b32.xlu0 %v12, 86
  %v71 = vpop.permute.xlu0 %70
  %72 = vrot.lane.b32.xlu0 %v13, 86
  %v73 = vpop.permute.xlu0 %72
  %74 = vrot.lane.b32.xlu0 %v14, 86
  %v75 = vpop.permute.xlu0 %74
  %76 = vrot.lane.b32.xlu0 %v15, 86
  %v77 = vpop.permute.xlu0 %76
  %vm78 = vcmp.lt.s32.totalorder %v25, 86
  %v79 = vsel %vm78, %v75, %v77
  %v80 = vsel %vm78, %v73, %v75
  %v81 = vsel %vm78, %v71, %v73
  %v82 = vsel %vm78, %v77, %v71
  %vm83 = vcmask 392192
  %v85 = vsel %vm83, %v11, 0
  %87 = vmatprep.subr.mxu0 %v13
  %88 = vmatpush1.msra.mxu0 %v12
  %89 = vmatprep.subr.mxu0 %v28
  %90 = vmatpush1.msra.mxu0 %v29
  %91 = vmatprep.subr.mxu0 %v41
  %92 = vmatpush1.msra.mxu0 %v42
  %93 = vmatprep.subr.mxu0 %v54
  %94 = vmatpush1.msra.mxu0 %v55
  %95 = vmatprep.subr.mxu0 %v67
  %96 = vmatpush1.msra.mxu0 %v68
  %97 = vmatprep.subr.mxu0 %v80
  %98 = vmatpush1.msra.mxu0 %v81
  %99 = vmatprep.subr.mxu0 0.0
  %100 = vmatpush1.msra.mxu0 0.0
  %101 = vmatprep.subr.mxu0 0.0
  %102 = vmatpush1.msra.mxu0 0.0
  %103 = vmatprep.subr.mxu0 0.0
  %104 = vmatpush1.msra.mxu0 0.0
  %105 = vmatprep.subr.mxu0 0.0
  %106 = vmatpush1.msra.mxu0 0.0
  %107 = vmatprep.subr.mxu0 0.0
  %108 = vmatpush1.msra.mxu0 0.0
  %109 = vmatprep.subr.mxu0 0.0
  %110 = vmatpush1.msra.mxu0 0.0
  %111 = vmatprep.subr.mxu0 0.0
  %112 = vmatpush1.msra.mxu0 0.0
  %113 = vmatprep.subr.mxu0 0.0
  %114 = vmatpush1.msra.mxu0 0.0
  %115 = vmatprep.subr.mxu0 0.0
  %116 = vmatpush1.msra.mxu0 0.0
  %117 = vmatprep.subr.mxu0 0.0
  %118 = vmatpush1.msra.mxu0 0.0
  %119 = vmatprep.subr.mxu0 0.0
  %120 = vmatpush1.msra.mxu0 0.0
  %121 = vmatprep.subr.mxu0 0.0
  %122 = vmatpush1.msra.mxu0 0.0
  %123 = vmatprep.subr.mxu0 0.0
  %124 = vmatpush1.msra.mxu0 0.0
  %125 = vmatprep.subr.mxu0 0.0
  %126 = vmatpush1.msra.mxu0 0.0
  %127 = vmatprep.subr.mxu0 0.0
  %128 = vmatpush1.msra.mxu0 0.0
  %129 = vmatprep.subr.mxu0 0.0
  %130 = vmatpush1.msra.mxu0 0.0
  %131 = vmatprep.subr.mxu0 0.0
  %132 = vmatpush1.msra.mxu0 0.0
  %133 = vmatprep.subr.mxu0 0.0
  %134 = vmatpush1.msra.mxu0 0.0
  %135 = vmatprep.subr.mxu0 0.0
  %136 = vmatpush1.msra.mxu0 0.0
  %137 = vmatprep.subr.mxu0 0.0
  %138 = vmatpush1.msra.mxu0 0.0
  %139 = vmatprep.subr.mxu0 0.0
  %140 = vmatpush1.msra.mxu0 0.0
  %141 = vmatprep.subr.mxu0 0.0
  %142 = vmatpush1.msra.mxu0 0.0
  %143 = vmatprep.subr.mxu0 0.0
  %144 = vmatpush1.msra.mxu0 0.0
  %145 = vmatprep.subr.mxu0 0.0
  %146 = vmatpush1.msra.mxu0 0.0
  %147 = vmatprep.subr.mxu0 0.0
  %148 = vmatpush1.msra.mxu0 0.0
  %149 = vmatprep.subr.mxu0 0.0
  %150 = vmatpush1.msra.mxu0 0.0
  %151 = vmatprep.mubr.f32.mxu0 0.0
  %152 = vmatmul.mubr.f32.gmra.mrb[0].mxu0 %v85
  %v153 = vpop.f32.mrb[0].mxu0
  %v154 = vadd.f32 0.0, %v153
  %v155 = vpop.f32.mrb[0].mxu0
  %v156 = vadd.f32 0.0, %v155
  %157 = vdwg.mxu0
  %158 = vmatprep.subr.mxu0 %v15
  %159 = vmatpush1.msra.mxu0 %v14
  %160 = vmatprep.subr.mxu0 %v30
  %161 = vmatpush1.msra.mxu0 %v27
  %162 = vmatprep.subr.mxu0 %v43
  %163 = vmatpush1.msra.mxu0 %v40
  %164 = vmatprep.subr.mxu0 %v56
  %165 = vmatpush1.msra.mxu0 %v53
  %166 = vmatprep.subr.mxu0 %v69
  %167 = vmatpush1.msra.mxu0 %v66
  %168 = vmatprep.subr.mxu0 %v82
  %169 = vmatpush1.msra.mxu0 %v79
  %170 = vmatprep.subr.mxu0 0.0
  %171 = vmatpush1.msra.mxu0 0.0
  %172 = vmatprep.subr.mxu0 0.0
  %173 = vmatpush1.msra.mxu0 0.0
  %174 = vmatprep.subr.mxu0 0.0
  %175 = vmatpush1.msra.mxu0 0.0
  %176 = vmatprep.subr.mxu0 0.0
  %177 = vmatpush1.msra.mxu0 0.0
  %178 = vmatprep.subr.mxu0 0.0
  %179 = vmatpush1.msra.mxu0 0.0
  %180 = vmatprep.subr.mxu0 0.0
  %181 = vmatpush1.msra.mxu0 0.0
  %182 = vmatprep.subr.mxu0 0.0
  %183 = vmatpush1.msra.mxu0 0.0
  %184 = vmatprep.subr.mxu0 0.0
  %185 = vmatpush1.msra.mxu0 0.0
  %186 = vmatprep.subr.mxu0 0.0
  %187 = vmatpush1.msra.mxu0 0.0
  %188 = vmatprep.subr.mxu0 0.0
  %189 = vmatpush1.msra.mxu0 0.0
  %190 = vmatprep.subr.mxu0 0.0
  %191 = vmatpush1.msra.mxu0 0.0
  %192 = vmatprep.subr.mxu0 0.0
  %193 = vmatpush1.msra.mxu0 0.0
  %194 = vmatprep.subr.mxu0 0.0
  %195 = vmatpush1.msra.mxu0 0.0
  %196 = vmatprep.subr.mxu0 0.0
  %197 = vmatpush1.msra.mxu0 0.0
  %198 = vmatprep.subr.mxu0 0.0
  %199 = vmatpush1.msra.mxu0 0.0
  %200 = vmatprep.subr.mxu0 0.0
  %201 = vmatpush1.msra.mxu0 0.0
  %202 = vmatprep.subr.mxu0 0.0
  %203 = vmatpush1.msra.mxu0 0.0
  %204 = vmatprep.subr.mxu0 0.0
  %205 = vmatpush1.msra.mxu0 0.0
  %206 = vmatprep.subr.mxu0 0.0
  %207 = vmatpush1.msra.mxu0 0.0
  %208 = vmatprep.subr.mxu0 0.0
  %209 = vmatpush1.msra.mxu0 0.0
  %210 = vmatprep.subr.mxu0 0.0
  %211 = vmatpush1.msra.mxu0 0.0
  %212 = vmatprep.subr.mxu0 0.0
  %213 = vmatpush1.msra.mxu0 0.0
  %214 = vmatprep.subr.mxu0 0.0
  %215 = vmatpush1.msra.mxu0 0.0
  %216 = vmatprep.subr.mxu0 0.0
  %217 = vmatpush1.msra.mxu0 0.0
  %218 = vmatprep.subr.mxu0 0.0
  %219 = vmatpush1.msra.mxu0 0.0
  %220 = vmatprep.subr.mxu0 0.0
  %221 = vmatpush1.msra.mxu0 0.0
  %222 = vmatprep.mubr.f32.mxu0 0.0
  %223 = vmatmul.mubr.f32.gmra.mrb[0].mxu0 %v85
  %v224 = vpop.f32.mrb[0].mxu0
  %v225 = vadd.f32 0.0, %v224
  %v226 = vpop.f32.mrb[0].mxu0
  %v227 = vadd.f32 0.0, %v226
  %228 = vdwg.mxu0
  %229 = vst [vmem:[%s2] sm:$0xff] %v154
  %230 = vst [vmem:[%s2 + $0x8] sm:$0xff] %v156
  %231 = vst [vmem:[%s2 + $0x10] sm:$0xff] %v225
  %232 = vst [vmem:[%s2 + $0x18] sm:$0xff] %v227
  %s233 = scalar_lea.vmem %s0, 32
  %v234 = vld [vmem:[%s233] sm:$0xff]
  %v235 = vld [vmem:[%s233 + $0x8] sm:$0xff]
  %v236 = vld [vmem:[%s233 + $0x10] sm:$0xff]
  %v237 = vld [vmem:[%s233 + $0x18] sm:$0xff]
  %238 = vrot.lane.b32.xlu0 %v234, 126
  %v239 = vpop.permute.xlu0 %238
  %240 = vrot.lane.b32.xlu0 %v235, 126
  %v241 = vpop.permute.xlu0 %240
  %242 = vrot.lane.b32.xlu0 %v236, 126
  %v243 = vpop.permute.xlu0 %242
  %244 = vrot.lane.b32.xlu0 %v237, 126
  %v245 = vpop.permute.xlu0 %244
  %v246 = vsel %vm26, %v243, %v245
  %v247 = vsel %vm26, %v241, %v243
  %v248 = vsel %vm26, %v239, %v241
  %v249 = vsel %vm26, %v245, %v239
  %250 = vrot.lane.b32.xlu0 %v234, 108
  %v251 = vpop.permute.xlu0 %250
  %252 = vrot.lane.b32.xlu0 %v235, 108
  %v253 = vpop.permute.xlu0 %252
  %254 = vrot.lane.b32.xlu0 %v236, 108
  %v255 = vpop.permute.xlu0 %254
  %256 = vrot.lane.b32.xlu0 %v237, 108
  %v257 = vpop.permute.xlu0 %256
  %v258 = vsel %vm39, %v255, %v257
  %v259 = vsel %vm39, %v253, %v255
  %v260 = vsel %vm39, %v251, %v253
  %v261 = vsel %vm39, %v257, %v251
  %262 = vrot.lane.b32.xlu0 %v234, 106
  %v263 = vpop.permute.xlu0 %262
  %264 = vrot.lane.b32.xlu0 %v235, 106
  %v265 = vpop.permute.xlu0 %264
  %266 = vrot.lane.b32.xlu0 %v236, 106
  %v267 = vpop.permute.xlu0 %266
  %268 = vrot.lane.b32.xlu0 %v237, 106
  %v269 = vpop.permute.xlu0 %268
  %v270 = vsel %vm52, %v267, %v269
  %v271 = vsel %vm52, %v265, %v267
  %v272 = vsel %vm52, %v263, %v265
  %v273 = vsel %vm52, %v269, %v263
  %274 = vrot.lane.b32.xlu0 %v234, 88
  %v275 = vpop.permute.xlu0 %274
  %276 = vrot.lane.b32.xlu0 %v235, 88
  %v277 = vpop.permute.xlu0 %276
  %278 = vrot.lane.b32.xlu0 %v236, 88
  %v279 = vpop.permute.xlu0 %278
  %280 = vrot.lane.b32.xlu0 %v237, 88
  %v281 = vpop.permute.xlu0 %280
  %v282 = vsel %vm65, %v279, %v281
  %v283 = vsel %vm65, %v277, %v279
  %v284 = vsel %vm65, %v275, %v277
  %v285 = vsel %vm65, %v281, %v275
  %286 = vrot.lane.b32.xlu0 %v234, 86
  %v287 = vpop.permute.xlu0 %286
  %288 = vrot.lane.b32.xlu0 %v235, 86
  %v289 = vpop.permute.xlu0 %288
  %290 = vrot.lane.b32.xlu0 %v236, 86
  %v291 = vpop.permute.xlu0 %290
  %292 = vrot.lane.b32.xlu0 %v237, 86
  %v293 = vpop.permute.xlu0 %292
  %v294 = vsel %vm78, %v291, %v293
  %v295 = vsel %vm78, %v289, %v291
  %v296 = vsel %vm78, %v287, %v289
  %v297 = vsel %vm78, %v293, %v287
  %298 = vmatprep.subr.mxu0 %v235
  %299 = vmatpush1.msra.mxu0 %v234
  %300 = vmatprep.subr.mxu0 %v247
  %301 = vmatpush1.msra.mxu0 %v248
  %302 = vmatprep.subr.mxu0 %v259
  %303 = vmatpush1.msra.mxu0 %v260
  %304 = vmatprep.subr.mxu0 %v271
  %305 = vmatpush1.msra.mxu0 %v272
  %306 = vmatprep.subr.mxu0 %v283
  %307 = vmatpush1.msra.mxu0 %v284
  %308 = vmatprep.subr.mxu0 %v295
  %309 = vmatpush1.msra.mxu0 %v296
  %310 = vmatprep.subr.mxu0 0.0
  %311 = vmatpush1.msra.mxu0 0.0
  %312 = vmatprep.subr.mxu0 0.0
  %313 = vmatpush1.msra.mxu0 0.0
  %314 = vmatprep.subr.mxu0 0.0
  %315 = vmatpush1.msra.mxu0 0.0
  %316 = vmatprep.subr.mxu0 0.0
  %317 = vmatpush1.msra.mxu0 0.0
  %318 = vmatprep.subr.mxu0 0.0
  %319 = vmatpush1.msra.mxu0 0.0
  %320 = vmatprep.subr.mxu0 0.0
  %321 = vmatpush1.msra.mxu0 0.0
  %322 = vmatprep.subr.mxu0 0.0
  %323 = vmatpush1.msra.mxu0 0.0
  %324 = vmatprep.subr.mxu0 0.0
  %325 = vmatpush1.msra.mxu0 0.0
  %326 = vmatprep.subr.mxu0 0.0
  %327 = vmatpush1.msra.mxu0 0.0
  %328 = vmatprep.subr.mxu0 0.0
  %329 = vmatpush1.msra.mxu0 0.0
  %330 = vmatprep.subr.mxu0 0.0
  %331 = vmatpush1.msra.mxu0 0.0
  %332 = vmatprep.subr.mxu0 0.0
  %333 = vmatpush1.msra.mxu0 0.0
  %334 = vmatprep.subr.mxu0 0.0
  %335 = vmatpush1.msra.mxu0 0.0
  %336 = vmatprep.subr.mxu0 0.0
  %337 = vmatpush1.msra.mxu0 0.0
  %338 = vmatprep.subr.mxu0 0.0
  %339 = vmatpush1.msra.mxu0 0.0
  %340 = vmatprep.subr.mxu0 0.0
  %341 = vmatpush1.msra.mxu0 0.0
  %342 = vmatprep.subr.mxu0 0.0
  %343 = vmatpush1.msra.mxu0 0.0
  %344 = vmatprep.subr.mxu0 0.0
  %345 = vmatpush1.msra.mxu0 0.0
  %346 = vmatprep.subr.mxu0 0.0
  %347 = vmatpush1.msra.mxu0 0.0
  %348 = vmatprep.subr.mxu0 0.0
  %349 = vmatpush1.msra.mxu0 0.0
  %350 = vmatprep.subr.mxu0 0.0
  %351 = vmatpush1.msra.mxu0 0.0
  %352 = vmatprep.subr.mxu0 0.0
  %353 = vmatpush1.msra.mxu0 0.0
  %354 = vmatprep.subr.mxu0 0.0
  %355 = vmatpush1.msra.mxu0 0.0
  %356 = vmatprep.subr.mxu0 0.0
  %357 = vmatpush1.msra.mxu0 0.0
  %358 = vmatprep.subr.mxu0 0.0
  %359 = vmatpush1.msra.mxu0 0.0
  %360 = vmatprep.subr.mxu0 0.0
  %361 = vmatpush1.msra.mxu0 0.0
  %362 = vmatprep.mubr.f32.mxu0 0.0
  %363 = vmatmul.mubr.f32.gmra.mrb[0].mxu0 %v85
  %v364 = vpop.f32.mrb[0].mxu0
  %v365 = vadd.f32 0.0, %v364
  %v366 = vpop.f32.mrb[0].mxu0
  %v367 = vadd.f32 0.0, %v366
  %368 = vdwg.mxu0
  %369 = vmatprep.subr.mxu0 %v237
  %370 = vmatpush1.msra.mxu0 %v236
  %371 = vmatprep.subr.mxu0 %v249
  %372 = vmatpush1.msra.mxu0 %v246
  %373 = vmatprep.subr.mxu0 %v261
  %374 = vmatpush1.msra.mxu0 %v258
  %375 = vmatprep.subr.mxu0 %v273
  %376 = vmatpush1.msra.mxu0 %v270
  %377 = vmatprep.subr.mxu0 %v285
  %378 = vmatpush1.msra.mxu0 %v282
  %379 = vmatprep.subr.mxu0 %v297
  %380 = vmatpush1.msra.mxu0 %v294
  %381 = vmatprep.subr.mxu0 0.0
  %382 = vmatpush1.msra.mxu0 0.0
  %383 = vmatprep.subr.mxu0 0.0
  %384 = vmatpush1.msra.mxu0 0.0
  %385 = vmatprep.subr.mxu0 0.0
  %386 = vmatpush1.msra.mxu0 0.0
  %387 = vmatprep.subr.mxu0 0.0
  %388 = vmatpush1.msra.mxu0 0.0
  %389 = vmatprep.subr.mxu0 0.0
  %390 = vmatpush1.msra.mxu0 0.0
  %391 = vmatprep.subr.mxu0 0.0
  %392 = vmatpush1.msra.mxu0 0.0
  %393 = vmatprep.subr.mxu0 0.0
  %394 = vmatpush1.msra.mxu0 0.0
  %395 = vmatprep.subr.mxu0 0.0
  %396 = vmatpush1.msra.mxu0 0.0
  %397 = vmatprep.subr.mxu0 0.0
  %398 = vmatpush1.msra.mxu0 0.0
  %399 = vmatprep.subr.mxu0 0.0
  %400 = vmatpush1.msra.mxu0 0.0
  %401 = vmatprep.subr.mxu0 0.0
  %402 = vmatpush1.msra.mxu0 0.0
  %403 = vmatprep.subr.mxu0 0.0
  %404 = vmatpush1.msra.mxu0 0.0
  %405 = vmatprep.subr.mxu0 0.0
  %406 = vmatpush1.msra.mxu0 0.0
  %407 = vmatprep.subr.mxu0 0.0
  %408 = vmatpush1.msra.mxu0 0.0
  %409 = vmatprep.subr.mxu0 0.0
  %410 = vmatpush1.msra.mxu0 0.0
  %411 = vmatprep.subr.mxu0 0.0
  %412 = vmatpush1.msra.mxu0 0.0
  %413 = vmatprep.subr.mxu0 0.0
  %414 = vmatpush1.msra.mxu0 0.0
  %415 = vmatprep.subr.mxu0 0.0
  %416 = vmatpush1.msra.mxu0 0.0
  %417 = vmatprep.subr.mxu0 0.0
  %418 = vmatpush1.msra.mxu0 0.0
  %419 = vmatprep.subr.mxu0 0.0
  %420 = vmatpush1.msra.mxu0 0.0
  %421 = vmatprep.subr.mxu0 0.0
  %422 = vmatpush1.msra.mxu0 0.0
  %423 = vmatprep.subr.mxu0 0.0
  %424 = vmatpush1.msra.mxu0 0.0
  %425 = vmatprep.subr.mxu0 0.0
  %426 = vmatpush1.msra.mxu0 0.0
  %427 = vmatprep.subr.mxu0 0.0
  %428 = vmatpush1.msra.mxu0 0.0
  %429 = vmatprep.subr.mxu0 0.0
  %430 = vmatpush1.msra.mxu0 0.0
  %431 = vmatprep.subr.mxu0 0.0
  %432 = vmatpush1.msra.mxu0 0.0
  %433 = vmatprep.mubr.f32.mxu0 0.0
  %434 = vmatmul.mubr.f32.gmra.mrb[0].mxu0 %v85
  %v435 = vpop.f32.mrb[0].mxu0
  %v436 = vadd.f32 0.0, %v435
  %v437 = vpop.f32.mrb[0].mxu0
  %v438 = vadd.f32 0.0, %v437
  %439 = vdwg.mxu0
  %s440 = scalar_lea.vmem %s2, 32
  %441 = vst [vmem:[%s440] sm:$0xff] %v365
  %442 = vst [vmem:[%s440 + $0x8] sm:$0xff] %v367
  %443 = vst [vmem:[%s440 + $0x10] sm:$0xff] %v436
  %444 = vst [vmem:[%s440 + $0x18] sm:$0xff] %v438
  // Predicated region
  $region10: #{conv2d_pallas.1} parent=0 // pred_check
    _
  $region11: #{conv2d_pallas.1} parent=0 // pred_check_branch
    %446 = sbr.rel (0) target = $region13
  $region12: #{conv2d_pallas.1} parent=0 // pred_region
    _
  $region13: #{conv2d_pallas.1} parent=0 // pred_fallthru
    _
  // Predicated region
  $region14: #{conv2d_pallas.1} parent=0 // pred_check
    _
  $region15: #{conv2d_pallas.1} parent=0 // pred_check_branch
    %448 = sbr.rel (0) target = $region17
  $region16: #{conv2d_pallas.1} parent=0 // pred_region
    _
  $region17: #{conv2d_pallas.1} parent=0 // pred_fallthru
    _

</llo_original>
